<compile_context>
chip_gen: v6e
topology: v6e:2x2x1
jax: 0.10.0
libtpu: 0.0.40
codegen_flags: <defaults>
</compile_context>

<pallas_src>
import functools

import jax
import jax.numpy as jnp
from jax.experimental import pallas as pl
from jax.experimental.pallas import tpu as pltpu

_LANES = 128          # points per lane group (vreg lane width)
_ROWS = 16            # sublane rows per inner-loop iteration (bf16-tile aligned)
_MAX_SUBTILES = 512   # max sublane-tiles per grid step (~9.5 MiB double-buffered)
_TARGET_STEPS = 8     # aim for >= 8 grid steps so v7x megacore gets >= 4 per TC


def _round_up(a, b):
    return -(-a // b) * b


def _sh4_kernel(inv_ref, x_ref, o_ref):
    # inv_ref: (1,) f32 in SMEM (1/size)
    # x_ref  : (3,  TS, 128) f32
    # o_ref  : (16, TS, 128) out_dtype
    inv = inv_ref[0]
    inv2 = inv * inv
    inv3 = inv2 * inv

    # fold 1/size into the SH constants via scalar (sreg) math
    c1 = 0.48860251190291987 * inv
    c2a = 1.0925484305920792 * inv2
    c2b = 0.94617469575755997 * inv2
    c2c = 0.54627421529603959 * inv2
    c3a = 0.59004358992664352 * inv3
    c3b = 2.8906114426405538 * inv3
    c3c = 0.45704579946446572 * inv
    c3d = 0.3731763325901154 * inv
    c3e = 1.4453057213202769 * inv3
    five_inv2 = 5.0 * inv2

    ts = x_ref.shape[1]
    odtype = o_ref.dtype

    # Iterate over (_ROWS, 128) sub-slabs so the working set (~25 vregs) stays in
    # registers instead of materializing (TS, 128) intermediates to VMEM.
    @pl.loop(0, ts // _ROWS)
    def _(i):
        r = pl.multiple_of(i * _ROWS, _ROWS)
        sl = pl.ds(r, _ROWS)
        x = x_ref[0, sl, :]
        y = x_ref[1, sl, :]
        z = x_ref[2, sl, :]

        xy = x * y
        xz = x * z
        yz = y * z
        x2 = x * x
        y2 = y * y
        z2 = z * z
        x2_m_y2 = x2 - y2
        t = five_inv2 * z2            # 5 * (z/size)^2
        one_m_5z2 = 1.0 - t
        five_z2_m3 = t - 3.0

        # degree 0
        o_ref[0, sl, :] = jnp.full_like(x, 0.28209479177387814).astype(odtype)
        # degree 1
        o_ref[1, sl, :] = (-c1 * y).astype(odtype)
        o_ref[2, sl, :] = (c1 * z).astype(odtype)
        o_ref[3, sl, :] = (-c1 * x).astype(odtype)
        # degree 2
        o_ref[4, sl, :] = (c2a * xy).astype(odtype)
        o_ref[5, sl, :] = (-c2a * yz).astype(odtype)
        o_ref[6, sl, :] = (c2b * z2 - 0.31539156525251999).astype(odtype)
        o_ref[7, sl, :] = (-c2a * xz).astype(odtype)
        o_ref[8, sl, :] = (c2c * x2_m_y2).astype(odtype)
        # degree 3
        o_ref[9, sl, :] = (c3a * (y * (y2 - 3.0 * x2))).astype(odtype)
        o_ref[10, sl, :] = (c3b * (xy * z)).astype(odtype)
        o_ref[11, sl, :] = (c3c * (y * one_m_5z2)).astype(odtype)
        o_ref[12, sl, :] = (c3d * (z * five_z2_m3)).astype(odtype)
        o_ref[13, sl, :] = (c3c * (x * one_m_5z2)).astype(odtype)
        o_ref[14, sl, :] = (c3e * (z * x2_m_y2)).astype(odtype)
        o_ref[15, sl, :] = (c3a * (x * (3.0 * y2 - x2))).astype(odtype)


@functools.partial(jax.jit,
                   static_argnames=("degree", "out_dtype", "transpose_output"))
def sh_encode(inputs, size=1.0, *, degree=4, out_dtype=jnp.float32,
              transpose_output=True):
    """Spherical-harmonics direction encoding (torch-ngp SHEncoder, degree=4).

    inputs: (..., 3). Returns (..., 16) if transpose_output else the K-major
    (16, B) slab (B = prod of the prefix shape), which avoids the final HBM
    transpose pass and can feed a downstream MLP matmul directly.
    """
    assert inputs.shape[-1] == 3, "SH encoder only supports input_dim == 3"
    assert degree == 4, "this Pallas kernel implements degree == 4 (output_dim = 16)"

    output_dim = degree ** 2
    prefix_shape = inputs.shape[:-1]

    flat = inputs.reshape(-1, 3).astype(jnp.float32)  # mirrors cast_inputs=torch.float32
    B = flat.shape[0]

    if B == 0:  # empty-batch guard (avoids a zero-size grid)
        if transpose_output:
            return jnp.zeros((*prefix_shape, output_dim), out_dtype)
        return jnp.zeros((output_dim, 0), out_dtype)

    nb = -(-B // _LANES)                       # 128-point lane groups
    nbr = _round_up(nb, _ROWS)                 # rounded to the sublane-tile size
    # tile size: big enough to amortize per-step overhead, small enough to give
    # >= _TARGET_STEPS grid steps (v7x megacore) with bounded padding waste.
    ts = min(_MAX_SUBTILES, max(_ROWS, _round_up(-(-nbr // _TARGET_STEPS), _ROWS)))
    steps = -(-nbr // ts)
    ts = _round_up(-(-nbr // steps), _ROWS)    # shrink ts to minimize trailing pad
    nbp = -(-nbr // ts) * ts
    Bp = nbp * _LANES

    # lane-dense layout: (3, nbp, 128), points on the lane axis, zero padded.
    xT = jnp.zeros((3, Bp), jnp.float32).at[:, :B].set(flat.T)
    x3 = xT.reshape(3, nbp, _LANES)

    # fold the `inputs / size` scaling into the kernel (no extra HBM pass).
    inv = (jnp.float32(1.0) / jnp.asarray(size, jnp.float32)).reshape(1)

    out3 = pl.pallas_call(
        _sh4_kernel,
        out_shape=jax.ShapeDtypeStruct((output_dim, nbp, _LANES), out_dtype),
        grid_spec=pltpu.PrefetchScalarGridSpec(
            num_scalar_prefetch=0,
            grid=(nbp // ts,),
            in_specs=[
                pl.BlockSpec(memory_space=pltpu.MemorySpace.SMEM),      # inv_size
                pl.BlockSpec((3, ts, _LANES), lambda i: (0, i, 0)),      # x/y/z
            ],
            out_specs=pl.BlockSpec((output_dim, ts, _LANES), lambda i: (0, i, 0)),
        ),
        compiler_params=pltpu.CompilerParams(
            dimension_semantics=("parallel",)),
    )(inv, x3)

    out_km = out3.reshape(output_dim, Bp)[:, :B]   # K-major (16, B) slab
    if not transpose_output:
        return out_km
    # transpose only to match the PyTorch module's (..., 16) output contract.
    return out_km.T.reshape(*prefix_shape, output_dim)


def _sh4_reference(inputs, size=1.0):
    """Pure-JAX reference mirroring torch-ngp shencoder.cu (degree 4)."""
    v = (inputs / size).reshape(-1, 3).astype(jnp.float32)
    x, y, z = v[:, 0], v[:, 1], v[:, 2]
    xy, xz, yz = x * y, x * z, y * z
    x2, y2, z2 = x * x, y * y, z * z
    cols = [
        jnp.full_like(x, 0.28209479177387814),
        -0.48860251190291987 * y,
        0.48860251190291987 * z,
        -0.48860251190291987 * x,
        1.0925484305920792 * xy,
        -1.0925484305920792 * yz,
        0.94617469575755997 * z2 - 0.31539156525251999,
        -1.0925484305920792 * xz,
        0.54627421529603959 * x2 - 0.54627421529603959 * y2,
        0.59004358992664352 * y * (-3.0 * x2 + y2),
        2.8906114426405538 * xy * z,
        0.45704579946446572 * y * (1.0 - 5.0 * z2),
        0.3731763325901154 * z * (5.0 * z2 - 3.0),
        0.45704579946446572 * x * (1.0 - 5.0 * z2),
        1.4453057213202769 * z * (x2 - y2),
        0.59004358992664352 * x * (-x2 + 3.0 * y2),
    ]
    out = jnp.stack(cols, axis=-1)
    return out.reshape(*inputs.shape[:-1], 16)


if __name__ == "__main__":
    key = jax.random.PRNGKey(0)
    # SHEncoder is fed view directions: shape (..., 3); prefix (2, 64) -> B = 128
    dirs = jax.random.normal(key, (2, 64, 3), dtype=jnp.float32)
    dirs = dirs / jnp.linalg.norm(dirs, axis=-1, keepdims=True)

    out = jax.block_until_ready(sh_encode(dirs, size=1.0, degree=4))
    ref = _sh4_reference(dirs, size=1.0)
    assert out.shape == (2, 64, 16), out.shape
    assert out.dtype == jnp.float32
    assert jnp.allclose(out, ref, atol=1e-5, rtol=1e-5), float(jnp.max(jnp.abs(out - ref)))

    # K-major (16, B) path: no final output transpose (feeds an MLP as the K dim)
    out_km = jax.block_until_ready(
        sh_encode(dirs, size=1.0, degree=4, transpose_output=False))
    assert out_km.shape == (16, 128), out_km.shape
    assert jnp.allclose(out_km, ref.reshape(-1, 16).T, atol=1e-5, rtol=1e-5)

    # ragged batch (exercises padding) + non-unit size (exercises fused 1/size)
    dirs2 = jax.random.normal(jax.random.PRNGKey(1), (333, 3), dtype=jnp.float32)
    out2 = jax.block_until_ready(sh_encode(dirs2, size=2.0, degree=4))
    ref2 = _sh4_reference(dirs2, size=2.0)
    assert out2.shape == (333, 16), out2.shape
    assert jnp.allclose(out2, ref2, atol=1e-5, rtol=1e-5), float(jnp.max(jnp.abs(out2 - ref2)))

    # bf16 output path (halves output HBM traffic; SH values are O(1))
    out_bf = jax.block_until_ready(
        sh_encode(dirs2, size=2.0, degree=4, out_dtype=jnp.bfloat16))
    assert out_bf.dtype == jnp.bfloat16
    assert jnp.allclose(out_bf.astype(jnp.float32), ref2, atol=2e-2, rtol=2e-2)

    # empty-batch guard
    out_empty = jax.block_until_ready(sh_encode(jnp.zeros((0, 3), jnp.float32)))
    assert out_empty.shape == (0, 16), out_empty.shape

    print("KERNEL_OK")
</pallas_src>

<mosaic_0001>
module attributes {stable_mosaic.version = 11 : i64} {
  func.func @_sh4_kernel(%arg0: i32, %arg1: memref<1xf32, #tpu.memory_space<smem>>, %arg2: memref<3x16x128xf32, #tpu.memory_space<vmem>>, %arg3: memref<16x16x128xf32, #tpu.memory_space<vmem>>) attributes {dimension_semantics = [#tpu.dimension_semantics<parallel>], iteration_bounds = array<i64: 1>, scalar_prefetch = 0 : i64, scratch_operands = 0 : i64, tpu.core_type = #tpu.core_type<tc>, window_params = [{transform_indices = @transform_0, window_bounds = array<i64: 1>}, {transform_indices = @transform_1, window_bounds = array<i64: 3, 16, 128>}, {transform_indices = @transform_2, window_bounds = array<i64: 16, 16, 128>}]} {
    %c0 = arith.constant 0 : index
    %0 = memref.load %arg1[%c0] : memref<1xf32, #tpu.memory_space<smem>>
    %1 = arith.mulf %0, %0 : f32
    %2 = arith.mulf %1, %0 : f32
    %cst = arith.constant 0.488602519 : f32
    %3 = arith.mulf %cst, %0 : f32
    %cst_0 = arith.constant 1.09254849 : f32
    %4 = arith.mulf %cst_0, %1 : f32
    %cst_1 = arith.constant 0.946174681 : f32
    %5 = arith.mulf %cst_1, %1 : f32
    %cst_2 = arith.constant 0.546274245 : f32
    %6 = arith.mulf %cst_2, %1 : f32
    %cst_3 = arith.constant 0.590043604 : f32
    %7 = arith.mulf %cst_3, %2 : f32
    %cst_4 = arith.constant 2.89061141 : f32
    %8 = arith.mulf %cst_4, %2 : f32
    %cst_5 = arith.constant 0.457045794 : f32
    %9 = arith.mulf %cst_5, %0 : f32
    %cst_6 = arith.constant 0.373176336 : f32
    %10 = arith.mulf %cst_6, %0 : f32
    %cst_7 = arith.constant 1.44530571 : f32
    %11 = arith.mulf %cst_7, %2 : f32
    %cst_8 = arith.constant 5.000000e+00 : f32
    %12 = arith.mulf %cst_8, %1 : f32
    %c0_i32 = arith.constant 0 : i32
    %c1_i32 = arith.constant 1 : i32
    %13 = arith.muli %c0_i32, %c1_i32 : i32
    %c0_i32_9 = arith.constant 0 : i32
    %14 = arith.addi %c0_i32_9, %13 : i32
    %c16_i32 = arith.constant 16 : i32
    %15 = arith.muli %14, %c16_i32 : i32
    %16 = tpu.assume_multiple %15, 16 : i32
    %c0_10 = arith.constant 0 : index
    %17 = arith.index_cast %16 : i32 to index
    %c0_11 = arith.constant 0 : index
    %18 = vector.load %arg2[%c0_10, %17, %c0_11] : memref<3x16x128xf32, #tpu.memory_space<vmem>>, vector<1x16x128xf32>
    %19 = vector.shape_cast %18 : vector<1x16x128xf32> to vector<16x128xf32>
    %c1 = arith.constant 1 : index
    %20 = arith.index_cast %16 : i32 to index
    %c0_12 = arith.constant 0 : index
    %21 = vector.load %arg2[%c1, %20, %c0_12] : memref<3x16x128xf32, #tpu.memory_space<vmem>>, vector<1x16x128xf32>
    %22 = vector.shape_cast %21 : vector<1x16x128xf32> to vector<16x128xf32>
    %c2 = arith.constant 2 : index
    %23 = arith.index_cast %16 : i32 to index
    %c0_13 = arith.constant 0 : index
    %24 = vector.load %arg2[%c2, %23, %c0_13] : memref<3x16x128xf32, #tpu.memory_space<vmem>>, vector<1x16x128xf32>
    %25 = vector.shape_cast %24 : vector<1x16x128xf32> to vector<16x128xf32>
    %26 = arith.mulf %19, %22 : vector<16x128xf32>
    %27 = arith.mulf %19, %25 : vector<16x128xf32>
    %28 = arith.mulf %22, %25 : vector<16x128xf32>
    %29 = arith.mulf %19, %19 : vector<16x128xf32>
    %30 = arith.mulf %22, %22 : vector<16x128xf32>
    %31 = arith.mulf %25, %25 : vector<16x128xf32>
    %32 = arith.subf %29, %30 : vector<16x128xf32>
    %33 = vector.broadcast %12 : f32 to vector<16x128xf32>
    %34 = arith.mulf %33, %31 : vector<16x128xf32>
    %cst_14 = arith.constant 1.000000e+00 : f32
    %35 = vector.broadcast %cst_14 : f32 to vector<16x128xf32>
    %36 = arith.subf %35, %34 : vector<16x128xf32>
    %cst_15 = arith.constant 3.000000e+00 : f32
    %37 = vector.broadcast %cst_15 : f32 to vector<16x128xf32>
    %38 = arith.subf %34, %37 : vector<16x128xf32>
    %cst_16 = arith.constant 0.282094806 : f32
    %39 = vector.broadcast %cst_16 : f32 to vector<16x128xf32>
    %c0_17 = arith.constant 0 : index
    %40 = arith.index_cast %16 : i32 to index
    %c0_18 = arith.constant 0 : index
    %41 = vector.load %arg3[%c0_17, %40, %c0_18] : memref<16x16x128xf32, #tpu.memory_space<vmem>>, vector<1x16x128xf32>
    %42 = vector.shape_cast %41 : vector<1x16x128xf32> to vector<16x128xf32>
    %43 = vector.shape_cast %39 : vector<16x128xf32> to vector<1x16x128xf32>
    tpu.vector_store %arg3[%c0_17, %40, %c0_18], %43 {strides = array<i32>} : memref<16x16x128xf32, #tpu.memory_space<vmem>>, vector<1x16x128xf32>,
    %cst_19 = arith.constant 0.000000e+00 : f32
    %44 = arith.subf %cst_19, %3 : f32
    %45 = vector.broadcast %44 : f32 to vector<16x128xf32>
    %46 = arith.mulf %45, %22 : vector<16x128xf32>
    %c1_20 = arith.constant 1 : index
    %47 = arith.index_cast %16 : i32 to index
    %c0_21 = arith.constant 0 : index
    %48 = vector.load %arg3[%c1_20, %47, %c0_21] : memref<16x16x128xf32, #tpu.memory_space<vmem>>, vector<1x16x128xf32>
    %49 = vector.shape_cast %48 : vector<1x16x128xf32> to vector<16x128xf32>
    %50 = vector.shape_cast %46 : vector<16x128xf32> to vector<1x16x128xf32>
    tpu.vector_store %arg3[%c1_20, %47, %c0_21], %50 {strides = array<i32>} : memref<16x16x128xf32, #tpu.memory_space<vmem>>, vector<1x16x128xf32>,
    %51 = vector.broadcast %3 : f32 to vector<16x128xf32>
    %52 = arith.mulf %51, %25 : vector<16x128xf32>
    %c2_22 = arith.constant 2 : index
    %53 = arith.index_cast %16 : i32 to index
    %c0_23 = arith.constant 0 : index
    %54 = vector.load %arg3[%c2_22, %53, %c0_23] : memref<16x16x128xf32, #tpu.memory_space<vmem>>, vector<1x16x128xf32>
    %55 = vector.shape_cast %54 : vector<1x16x128xf32> to vector<16x128xf32>
    %56 = vector.shape_cast %52 : vector<16x128xf32> to vector<1x16x128xf32>
    tpu.vector_store %arg3[%c2_22, %53, %c0_23], %56 {strides = array<i32>} : memref<16x16x128xf32, #tpu.memory_space<vmem>>, vector<1x16x128xf32>,
    %cst_24 = arith.constant 0.000000e+00 : f32
    %57 = arith.subf %cst_24, %3 : f32
    %58 = vector.broadcast %57 : f32 to vector<16x128xf32>
    %59 = arith.mulf %58, %19 : vector<16x128xf32>
    %c3 = arith.constant 3 : index
    %60 = arith.index_cast %16 : i32 to index
    %c0_25 = arith.constant 0 : index
    %61 = vector.load %arg3[%c3, %60, %c0_25] : memref<16x16x128xf32, #tpu.memory_space<vmem>>, vector<1x16x128xf32>
    %62 = vector.shape_cast %61 : vector<1x16x128xf32> to vector<16x128xf32>
    %63 = vector.shape_cast %59 : vector<16x128xf32> to vector<1x16x128xf32>
    tpu.vector_store %arg3[%c3, %60, %c0_25], %63 {strides = array<i32>} : memref<16x16x128xf32, #tpu.memory_space<vmem>>, vector<1x16x128xf32>,
    %64 = vector.broadcast %4 : f32 to vector<16x128xf32>
    %65 = arith.mulf %64, %26 : vector<16x128xf32>
    %c4 = arith.constant 4 : index
    %66 = arith.index_cast %16 : i32 to index
    %c0_26 = arith.constant 0 : index
    %67 = vector.load %arg3[%c4, %66, %c0_26] : memref<16x16x128xf32, #tpu.memory_space<vmem>>, vector<1x16x128xf32>
    %68 = vector.shape_cast %67 : vector<1x16x128xf32> to vector<16x128xf32>
    %69 = vector.shape_cast %65 : vector<16x128xf32> to vector<1x16x128xf32>
    tpu.vector_store %arg3[%c4, %66, %c0_26], %69 {strides = array<i32>} : memref<16x16x128xf32, #tpu.memory_space<vmem>>, vector<1x16x128xf32>,
    %cst_27 = arith.constant 0.000000e+00 : f32
    %70 = arith.subf %cst_27, %4 : f32
    %71 = vector.broadcast %70 : f32 to vector<16x128xf32>
    %72 = arith.mulf %71, %28 : vector<16x128xf32>
    %c5 = arith.constant 5 : index
    %73 = arith.index_cast %16 : i32 to index
    %c0_28 = arith.constant 0 : index
    %74 = vector.load %arg3[%c5, %73, %c0_28] : memref<16x16x128xf32, #tpu.memory_space<vmem>>, vector<1x16x128xf32>
    %75 = vector.shape_cast %74 : vector<1x16x128xf32> to vector<16x128xf32>
    %76 = vector.shape_cast %72 : vector<16x128xf32> to vector<1x16x128xf32>
    tpu.vector_store %arg3[%c5, %73, %c0_28], %76 {strides = array<i32>} : memref<16x16x128xf32, #tpu.memory_space<vmem>>, vector<1x16x128xf32>,
    %77 = vector.broadcast %5 : f32 to vector<16x128xf32>
    %78 = arith.mulf %77, %31 : vector<16x128xf32>
    %cst_29 = arith.constant 0.31539157 : f32
    %79 = vector.broadcast %cst_29 : f32 to vector<16x128xf32>
    %80 = arith.subf %78, %79 : vector<16x128xf32>
    %c6 = arith.constant 6 : index
    %81 = arith.index_cast %16 : i32 to index
    %c0_30 = arith.constant 0 : index
    %82 = vector.load %arg3[%c6, %81, %c0_30] : memref<16x16x128xf32, #tpu.memory_space<vmem>>, vector<1x16x128xf32>
    %83 = vector.shape_cast %82 : vector<1x16x128xf32> to vector<16x128xf32>
    %84 = vector.shape_cast %80 : vector<16x128xf32> to vector<1x16x128xf32>
    tpu.vector_store %arg3[%c6, %81, %c0_30], %84 {strides = array<i32>} : memref<16x16x128xf32, #tpu.memory_space<vmem>>, vector<1x16x128xf32>,
    %cst_31 = arith.constant 0.000000e+00 : f32
    %85 = arith.subf %cst_31, %4 : f32
    %86 = vector.broadcast %85 : f32 to vector<16x128xf32>
    %87 = arith.mulf %86, %27 : vector<16x128xf32>
    %c7 = arith.constant 7 : index
    %88 = arith.index_cast %16 : i32 to index
    %c0_32 = arith.constant 0 : index
    %89 = vector.load %arg3[%c7, %88, %c0_32] : memref<16x16x128xf32, #tpu.memory_space<vmem>>, vector<1x16x128xf32>
    %90 = vector.shape_cast %89 : vector<1x16x128xf32> to vector<16x128xf32>
    %91 = vector.shape_cast %87 : vector<16x128xf32> to vector<1x16x128xf32>
    tpu.vector_store %arg3[%c7, %88, %c0_32], %91 {strides = array<i32>} : memref<16x16x128xf32, #tpu.memory_space<vmem>>, vector<1x16x128xf32>,
    %92 = vector.broadcast %6 : f32 to vector<16x128xf32>
    %93 = arith.mulf %92, %32 : vector<16x128xf32>
    %c8 = arith.constant 8 : index
    %94 = arith.index_cast %16 : i32 to index
    %c0_33 = arith.constant 0 : index
    %95 = vector.load %arg3[%c8, %94, %c0_33] : memref<16x16x128xf32, #tpu.memory_space<vmem>>, vector<1x16x128xf32>
    %96 = vector.shape_cast %95 : vector<1x16x128xf32> to vector<16x128xf32>
    %97 = vector.shape_cast %93 : vector<16x128xf32> to vector<1x16x128xf32>
    tpu.vector_store %arg3[%c8, %94, %c0_33], %97 {strides = array<i32>} : memref<16x16x128xf32, #tpu.memory_space<vmem>>, vector<1x16x128xf32>,
    %cst_34 = arith.constant 3.000000e+00 : f32
    %98 = vector.broadcast %cst_34 : f32 to vector<16x128xf32>
    %99 = arith.mulf %98, %29 : vector<16x128xf32>
    %100 = arith.subf %30, %99 : vector<16x128xf32>
    %101 = arith.mulf %22, %100 : vector<16x128xf32>
    %102 = vector.broadcast %7 : f32 to vector<16x128xf32>
    %103 = arith.mulf %102, %101 : vector<16x128xf32>
    %c9 = arith.constant 9 : index
    %104 = arith.index_cast %16 : i32 to index
    %c0_35 = arith.constant 0 : index
    %105 = vector.load %arg3[%c9, %104, %c0_35] : memref<16x16x128xf32, #tpu.memory_space<vmem>>, vector<1x16x128xf32>
    %106 = vector.shape_cast %105 : vector<1x16x128xf32> to vector<16x128xf32>
    %107 = vector.shape_cast %103 : vector<16x128xf32> to vector<1x16x128xf32>
    tpu.vector_store %arg3[%c9, %104, %c0_35], %107 {strides = array<i32>} : memref<16x16x128xf32, #tpu.memory_space<vmem>>, vector<1x16x128xf32>,
    %108 = arith.mulf %26, %25 : vector<16x128xf32>
    %109 = vector.broadcast %8 : f32 to vector<16x128xf32>
    %110 = arith.mulf %109, %108 : vector<16x128xf32>
    %c10 = arith.constant 10 : index
    %111 = arith.index_cast %16 : i32 to index
    %c0_36 = arith.constant 0 : index
    %112 = vector.load %arg3[%c10, %111, %c0_36] : memref<16x16x128xf32, #tpu.memory_space<vmem>>, vector<1x16x128xf32>
    %113 = vector.shape_cast %112 : vector<1x16x128xf32> to vector<16x128xf32>
    %114 = vector.shape_cast %110 : vector<16x128xf32> to vector<1x16x128xf32>
    tpu.vector_store %arg3[%c10, %111, %c0_36], %114 {strides = array<i32>} : memref<16x16x128xf32, #tpu.memory_space<vmem>>, vector<1x16x128xf32>,
    %115 = arith.mulf %22, %36 : vector<16x128xf32>
    %116 = vector.broadcast %9 : f32 to vector<16x128xf32>
    %117 = arith.mulf %116, %115 : vector<16x128xf32>
    %c11 = arith.constant 11 : index
    %118 = arith.index_cast %16 : i32 to index
    %c0_37 = arith.constant 0 : index
    %119 = vector.load %arg3[%c11, %118, %c0_37] : memref<16x16x128xf32, #tpu.memory_space<vmem>>, vector<1x16x128xf32>
    %120 = vector.shape_cast %119 : vector<1x16x128xf32> to vector<16x128xf32>
    %121 = vector.shape_cast %117 : vector<16x128xf32> to vector<1x16x128xf32>
    tpu.vector_store %arg3[%c11, %118, %c0_37], %121 {strides = array<i32>} : memref<16x16x128xf32, #tpu.memory_space<vmem>>, vector<1x16x128xf32>,
    %122 = arith.mulf %25, %38 : vector<16x128xf32>
    %123 = vector.broadcast %10 : f32 to vector<16x128xf32>
    %124 = arith.mulf %123, %122 : vector<16x128xf32>
    %c12 = arith.constant 12 : index
    %125 = arith.index_cast %16 : i32 to index
    %c0_38 = arith.constant 0 : index
    %126 = vector.load %arg3[%c12, %125, %c0_38] : memref<16x16x128xf32, #tpu.memory_space<vmem>>, vector<1x16x128xf32>
    %127 = vector.shape_cast %126 : vector<1x16x128xf32> to vector<16x128xf32>
    %128 = vector.shape_cast %124 : vector<16x128xf32> to vector<1x16x128xf32>
    tpu.vector_store %arg3[%c12, %125, %c0_38], %128 {strides = array<i32>} : memref<16x16x128xf32, #tpu.memory_space<vmem>>, vector<1x16x128xf32>,
    %129 = arith.mulf %19, %36 : vector<16x128xf32>
    %130 = vector.broadcast %9 : f32 to vector<16x128xf32>
    %131 = arith.mulf %130, %129 : vector<16x128xf32>
    %c13 = arith.constant 13 : index
    %132 = arith.index_cast %16 : i32 to index
    %c0_39 = arith.constant 0 : index
    %133 = vector.load %arg3[%c13, %132, %c0_39] : memref<16x16x128xf32, #tpu.memory_space<vmem>>, vector<1x16x128xf32>
    %134 = vector.shape_cast %133 : vector<1x16x128xf32> to vector<16x128xf32>
    %135 = vector.shape_cast %131 : vector<16x128xf32> to vector<1x16x128xf32>
    tpu.vector_store %arg3[%c13, %132, %c0_39], %135 {strides = array<i32>} : memref<16x16x128xf32, #tpu.memory_space<vmem>>, vector<1x16x128xf32>,
    %136 = arith.mulf %25, %32 : vector<16x128xf32>
    %137 = vector.broadcast %11 : f32 to vector<16x128xf32>
    %138 = arith.mulf %137, %136 : vector<16x128xf32>
    %c14 = arith.constant 14 : index
    %139 = arith.index_cast %16 : i32 to index
    %c0_40 = arith.constant 0 : index
    %140 = vector.load %arg3[%c14, %139, %c0_40] : memref<16x16x128xf32, #tpu.memory_space<vmem>>, vector<1x16x128xf32>
    %141 = vector.shape_cast %140 : vector<1x16x128xf32> to vector<16x128xf32>
    %142 = vector.shape_cast %138 : vector<16x128xf32> to vector<1x16x128xf32>
    tpu.vector_store %arg3[%c14, %139, %c0_40], %142 {strides = array<i32>} : memref<16x16x128xf32, #tpu.memory_space<vmem>>, vector<1x16x128xf32>,
    %cst_41 = arith.constant 3.000000e+00 : f32
    %143 = vector.broadcast %cst_41 : f32 to vector<16x128xf32>
    %144 = arith.mulf %143, %30 : vector<16x128xf32>
    %145 = arith.subf %144, %29 : vector<16x128xf32>
    %146 = arith.mulf %19, %145 : vector<16x128xf32>
    %147 = vector.broadcast %7 : f32 to vector<16x128xf32>
    %148 = arith.mulf %147, %146 : vector<16x128xf32>
    %c15 = arith.constant 15 : index
    %149 = arith.index_cast %16 : i32 to index
    %c0_42 = arith.constant 0 : index
    %150 = vector.load %arg3[%c15, %149, %c0_42] : memref<16x16x128xf32, #tpu.memory_space<vmem>>, vector<1x16x128xf32>
    %151 = vector.shape_cast %150 : vector<1x16x128xf32> to vector<16x128xf32>
    %152 = vector.shape_cast %148 : vector<16x128xf32> to vector<1x16x128xf32>
    tpu.vector_store %arg3[%c15, %149, %c0_42], %152 {strides = array<i32>} : memref<16x16x128xf32, #tpu.memory_space<vmem>>, vector<1x16x128xf32>,
    %c1_i32_43 = arith.constant 1 : i32
    return
  }
  func.func @transform_0(%arg0: i32) -> i32 {
    %c0_i32 = arith.constant 0 : i32
    %c0_i32_0 = arith.constant 0 : i32
    return %c0_i32 : i32
  }
  func.func @transform_1(%arg0: i32) -> (i32, i32, i32) {
    %c0_i32 = arith.constant 0 : i32
    %c0_i32_0 = arith.constant 0 : i32
    %c0_i32_1 = arith.constant 0 : i32
    return %c0_i32, %arg0, %c0_i32_0 : i32, i32, i32
  }
  func.func @transform_2(%arg0: i32) -> (i32, i32, i32) {
    %c0_i32 = arith.constant 0 : i32
    %c0_i32_0 = arith.constant 0 : i32
    %c0_i32_1 = arith.constant 0 : i32
    return %c0_i32, %arg0, %c0_i32_0 : i32, i32, i32
  }
}

</mosaic_0001>

<llo_original>
// kernel: sh_encode.1
$region0: #{sh_encode.1}
  #allocation0 [shape = 'u32[]', space=smem, size = 0x4, offset = 0x4, fixed_abs, tag = 'smem constant byte address 0x4 - core index']
  #allocation1 [shape = 'u32[144,128]{1,0:T(1,128)}', space=vmem, size = 0x12000, scoped, tag = 'internal scratch']
  #allocation2 [shape = 'f32[1]{0:T(128)S(6)}', space=smem, size = 0x200, scoped, tag = 'scoped memory for sh_encode.1']
  %s0 = inlined_call_operand.<no memory space> [shape: f32[1], index: 0, kind: input, shape index: {}]
  %s1 = inlined_call_operand.vmem [shape: f32[3,16,128], index: 1, kind: input, shape index: {}]
  %s2 = inlined_call_operand.vmem [shape: f32[16,16,128], index: 2, kind: output, shape index: {}]
  %s3 = sld [smem:[#allocation0]]
  $region18: #{sh_encode.1} parent=0
    _
  %s5 = ssub.s32 1, %s3
  %s6 = scalar_select 0, %s5, %s3
  %7 = sst [smem:[#allocation2]] %s0
  // Predicated region
  $region2: #{sh_encode.1} parent=0 // pred_check
    _
  $region3: #{sh_encode.1} parent=0 // pred_check_branch
    %9 = sbr.rel (0) target = $region5
  $region4: #{sh_encode.1} parent=0 // pred_region
    _
  $region5: #{sh_encode.1} parent=0 // pred_fallthru
    _
  // Predicated region
  $region6: #{sh_encode.1} parent=0 // pred_check
    _
  $region7: #{sh_encode.1} parent=0 // pred_check_branch
    %11 = sbr.rel (0) target = $region9
  $region8: #{sh_encode.1} parent=0 // pred_region
    _
  $region9: #{sh_encode.1} parent=0 // pred_fallthru
    _
  %s12 = sld [smem:[#allocation2]]
  %s13 = smul.f32 %s12, %s12
  %s14 = smul.f32 %s13, %s12
  %s15 = smul.f32 %s12, 0.48860252
  %s16 = smul.f32 %s13, 1.0925485
  %s17 = smul.f32 %s13, 0.9461747
  %s18 = smul.f32 %s13, 0.54627424
  %s19 = smul.f32 %s14, 0.5900436
  %s20 = smul.f32 %s14, 2.8906114
  %s21 = smul.f32 %s12, 0.4570458
  %s22 = smul.f32 %s12, 0.37317634
  %s23 = smul.f32 %s14, 1.4453057
  %s24 = smul.f32 %s13, 5.0
  %v25 = vld [vmem:[%s1] sm:$0xff]
  %v26 = vld [vmem:[%s1 + $0x8] sm:$0xff]
  %s27 = sadd.s32 0, 16
  %s28 = scalar_lea.vmem %s1, %s27
  %v29 = vld [vmem:[%s28] sm:$0xff]
  %v30 = vld [vmem:[%s28 + $0x8] sm:$0xff]
  %s31 = sadd.s32 0, 32
  %s32 = scalar_lea.vmem %s1, %s31
  %v33 = vld [vmem:[%s32] sm:$0xff]
  %v34 = vld [vmem:[%s32 + $0x8] sm:$0xff]
  %v35 = vmul.f32 %v25, %v29
  %v36 = vmul.f32 %v26, %v30
  %v37 = vmul.f32 %v25, %v33
  %v38 = vmul.f32 %v26, %v34
  %v39 = vmul.f32 %v29, %v33
  %v40 = vmul.f32 %v30, %v34
  %v41 = vmul.f32 %v25, %v25
  %v42 = vmul.f32 %v26, %v26
  %v43 = vmul.f32 %v29, %v29
  %v44 = vmul.f32 %v30, %v30
  %v45 = vmul.f32 %v33, %v33
  %v46 = vmul.f32 %v34, %v34
  %v47 = vsub.f32 %v41, %v43
  %v48 = vsub.f32 %v42, %v44
  %v49 = vstv %s24
  %v50 = vmul.f32 %v49, %v45
  %v51 = vmul.f32 %v49, %v46
  %v52 = vsub.f32 1.0, %v50
  %v53 = vsub.f32 1.0, %v51
  %v54 = vsub.f32 %v50, 3.0
  %v55 = vsub.f32 %v51, 3.0
  %56 = vst [vmem:[%s2] sm:$0xff] 0.2820948
  %57 = vst [vmem:[%s2 + $0x8] sm:$0xff] 0.2820948
  %s58 = ssub.f32 0.0, %s15
  %v59 = vstv %s58
  %v60 = vmul.f32 %v59, %v29
  %v61 = vmul.f32 %v59, %v30
  %s62 = scalar_lea.vmem %s2, %s27
  %63 = vst [vmem:[%s62] sm:$0xff] %v60
  %64 = vst [vmem:[%s62 + $0x8] sm:$0xff] %v61
  %v65 = vstv %s15
  %v66 = vmul.f32 %v65, %v33
  %v67 = vmul.f32 %v65, %v34
  %s68 = scalar_lea.vmem %s2, %s31
  %69 = vst [vmem:[%s68] sm:$0xff] %v66
  %70 = vst [vmem:[%s68 + $0x8] sm:$0xff] %v67
  %v71 = vmul.f32 %v59, %v25
  %v72 = vmul.f32 %v59, %v26
  %s73 = sadd.s32 0, 48
  %s74 = scalar_lea.vmem %s2, %s73
  %75 = vst [vmem:[%s74] sm:$0xff] %v71
  %76 = vst [vmem:[%s74 + $0x8] sm:$0xff] %v72
  %v77 = vstv %s16
  %v78 = vmul.f32 %v77, %v35
  %v79 = vmul.f32 %v77, %v36
  %s80 = sadd.s32 0, 64
  %s81 = scalar_lea.vmem %s2, %s80
  %82 = vst [vmem:[%s81] sm:$0xff] %v78
  %83 = vst [vmem:[%s81 + $0x8] sm:$0xff] %v79
  %s84 = ssub.f32 0.0, %s16
  %v85 = vstv %s84
  %v86 = vmul.f32 %v85, %v39
  %v87 = vmul.f32 %v85, %v40
  %s88 = sadd.s32 0, 80
  %s89 = scalar_lea.vmem %s2, %s88
  %90 = vst [vmem:[%s89] sm:$0xff] %v86
  %91 = vst [vmem:[%s89 + $0x8] sm:$0xff] %v87
  %v92 = vstv %s17
  %v93 = vmul.f32 %v92, %v45
  %v94 = vmul.f32 %v92, %v46
  %v95 = vsub.f32 %v93, 0.31539157
  %v96 = vsub.f32 %v94, 0.31539157
  %s97 = sadd.s32 0, 96
  %s98 = scalar_lea.vmem %s2, %s97
  %99 = vst [vmem:[%s98] sm:$0xff] %v95
  %100 = vst [vmem:[%s98 + $0x8] sm:$0xff] %v96
  %v101 = vmul.f32 %v85, %v37
  %v102 = vmul.f32 %v85, %v38
  %s103 = sadd.s32 0, 112
  %s104 = scalar_lea.vmem %s2, %s103
  %105 = vst [vmem:[%s104] sm:$0xff] %v101
  %106 = vst [vmem:[%s104 + $0x8] sm:$0xff] %v102
  %v107 = vstv %s18
  %v108 = vmul.f32 %v107, %v47
  %v109 = vmul.f32 %v107, %v48
  %s110 = sadd.s32 0, 128
  %s111 = scalar_lea.vmem %s2, %s110
  %112 = vst [vmem:[%s111] sm:$0xff] %v108
  %113 = vst [vmem:[%s111 + $0x8] sm:$0xff] %v109
  %v114 = vmul.f32 %v41, 3.0
  %v115 = vmul.f32 %v42, 3.0
  %v116 = vsub.f32 %v43, %v114
  %v117 = vsub.f32 %v44, %v115
  %v118 = vmul.f32 %v29, %v116
  %v119 = vmul.f32 %v30, %v117
  %v120 = vstv %s19
  %v121 = vmul.f32 %v120, %v118
  %v122 = vmul.f32 %v120, %v119
  %s123 = sadd.s32 0, 144
  %s124 = scalar_lea.vmem %s2, %s123
  %125 = vst [vmem:[%s124] sm:$0xff] %v121
  %126 = vst [vmem:[%s124 + $0x8] sm:$0xff] %v122
  %v127 = vmul.f32 %v35, %v33
  %v128 = vmul.f32 %v36, %v34
  %v129 = vstv %s20
  %v130 = vmul.f32 %v129, %v127
  %v131 = vmul.f32 %v129, %v128
  %s132 = sadd.s32 0, 160
  %s133 = scalar_lea.vmem %s2, %s132
  %134 = vst [vmem:[%s133] sm:$0xff] %v130
  %135 = vst [vmem:[%s133 + $0x8] sm:$0xff] %v131
  %v136 = vmul.f32 %v29, %v52
  %v137 = vmul.f32 %v30, %v53
  %v138 = vstv %s21
  %v139 = vmul.f32 %v138, %v136
  %v140 = vmul.f32 %v138, %v137
  %s141 = sadd.s32 0, 176
  %s142 = scalar_lea.vmem %s2, %s141
  %143 = vst [vmem:[%s142] sm:$0xff] %v139
  %144 = vst [vmem:[%s142 + $0x8] sm:$0xff] %v140
  %v145 = vmul.f32 %v33, %v54
  %v146 = vmul.f32 %v34, %v55
  %v147 = vstv %s22
  %v148 = vmul.f32 %v147, %v145
  %v149 = vmul.f32 %v147, %v146
  %s150 = sadd.s32 0, 192
  %s151 = scalar_lea.vmem %s2, %s150
  %152 = vst [vmem:[%s151] sm:$0xff] %v148
  %153 = vst [vmem:[%s151 + $0x8] sm:$0xff] %v149
  %v154 = vmul.f32 %v25, %v52
  %v155 = vmul.f32 %v26, %v53
  %v156 = vmul.f32 %v138, %v154
  %v157 = vmul.f32 %v138, %v155
  %s158 = sadd.s32 0, 208
  %s159 = scalar_lea.vmem %s2, %s158
  %160 = vst [vmem:[%s159] sm:$0xff] %v156
  %161 = vst [vmem:[%s159 + $0x8] sm:$0xff] %v157
  %v162 = vmul.f32 %v33, %v47
  %v163 = vmul.f32 %v34, %v48
  %v164 = vstv %s23
  %v165 = vmul.f32 %v164, %v162
  %v166 = vmul.f32 %v164, %v163
  %s167 = sadd.s32 0, 224
  %s168 = scalar_lea.vmem %s2, %s167
  %169 = vst [vmem:[%s168] sm:$0xff] %v165
  %170 = vst [vmem:[%s168 + $0x8] sm:$0xff] %v166
  %v171 = vmul.f32 %v43, 3.0
  %v172 = vmul.f32 %v44, 3.0
  %v173 = vsub.f32 %v171, %v41
  %v174 = vsub.f32 %v172, %v42
  %v175 = vmul.f32 %v25, %v173
  %v176 = vmul.f32 %v26, %v174
  %v177 = vmul.f32 %v120, %v175
  %v178 = vmul.f32 %v120, %v176
  %s179 = sadd.s32 0, 240
  %s180 = scalar_lea.vmem %s2, %s179
  %181 = vst [vmem:[%s180] sm:$0xff] %v177
  %182 = vst [vmem:[%s180 + $0x8] sm:$0xff] %v178
  // Predicated region
  $region10: #{sh_encode.1} parent=0 // pred_check
    _
  $region11: #{sh_encode.1} parent=0 // pred_check_branch
    %184 = sbr.rel (0) target = $region13
  $region12: #{sh_encode.1} parent=0 // pred_region
    _
  $region13: #{sh_encode.1} parent=0 // pred_fallthru
    _
  // Predicated region
  $region14: #{sh_encode.1} parent=0 // pred_check
    _
  $region15: #{sh_encode.1} parent=0 // pred_check_branch
    %186 = sbr.rel (0) target = $region17
  $region16: #{sh_encode.1} parent=0 // pred_region
    _
  $region17: #{sh_encode.1} parent=0 // pred_fallthru
    _

</llo_original>
